<compile_context>
chip_gen: v5e
topology: v5e:2x2
jax: 0.10.0
libtpu: 0.0.40
codegen_flags: <defaults>
</compile_context>

<pallas_src>
import math
import functools

import jax
import jax.numpy as jnp
from jax.experimental import pallas as pl
from jax.experimental.pallas import tpu as pltpu


# ----------------------------------------------------------------------------
# Kernel: InstanceNorm1d over the sequence axis + (1 + scale) * x_hat + shift
# fused into a single per-element FMA.
# ----------------------------------------------------------------------------
def _ada_ins_norm_kernel(scale_ref, shift_ref, x_ref, out_ref, *,
                         eps, inv_t, two_pass):
    """One grid step == `block_b` batch elements.

    scale_ref : VMEM (Bb, 1, C) f32
    shift_ref : VMEM (Bb, 1, C) f32
    x_ref     : VMEM (Bb, T, C) input dtype (f32 or bf16)
    out_ref   : VMEM (Bb, T, C) same dtype as x
    """
    xf = x_ref[...].astype(jnp.float32)                    # (Bb, T, C)

    if two_pass:
        # Centered (numerically safest) formula for |mean| >> std inputs.
        mean = jnp.mean(xf, axis=1, keepdims=True)          # (Bb, 1, C)
        cen = xf - mean
        var = jnp.mean(cen * cen, axis=1, keepdims=True)
    else:
        # One-pass moments with f32 accumulation: var = E[x^2] - mean^2.
        s1 = jnp.sum(xf, axis=1, keepdims=True)              # (Bb, 1, C)
        s2 = jnp.sum(xf * xf, axis=1, keepdims=True)
        mean = s1 * inv_t
        var = jnp.maximum(s2 * inv_t - mean * mean, 0.0)

    # out = x_hat * (1 + scale) + shift  ==  x * a + b   (one FMA per element)
    a = jax.lax.rsqrt(var + eps) * (1.0 + scale_ref[...])    # (Bb, 1, C)
    b = shift_ref[...] - mean * a                            # (Bb, 1, C)
    out_ref[...] = (xf * a + b).astype(out_ref.dtype)


# ----------------------------------------------------------------------------
# Wrapper-side pre-pass: SinusoidalPosEmb -> SiLU -> Linear -> chunk
# ----------------------------------------------------------------------------
def _timestep_scale_shift(timestep, w_t, bias, C, num_steps, rescale_steps):
    """Returns (scale, shift), each (B, C) float32."""
    half = C // 2
    # NOTE: SinusoidalPosEmb requires n_embd >= 4 (half >= 2) so (half-1) != 0.
    t = timestep.astype(jnp.float32) / num_steps * rescale_steps
    freqs = jnp.exp(jnp.arange(half, dtype=jnp.float32)
                    * -(math.log(10000.0) / (half - 1)))
    e = t[:, None] * freqs[None, :]
    emb = jnp.concatenate([jnp.sin(e), jnp.cos(e)], axis=-1)          # (B, C)
    emb = emb * jax.nn.sigmoid(emb)                                   # SiLU
    proj = emb @ w_t.astype(jnp.float32) + bias.astype(jnp.float32)[None, :]
    return proj[:, :C], proj[:, C:]                                   # scale, shift


# ----------------------------------------------------------------------------
# Generation-aware tiling heuristics
# ----------------------------------------------------------------------------
def _tile_budget():
    """(target tile bytes, vmem_limit cap, min grid steps), from VMEM size."""
    try:
        vmem = int(pltpu.get_tpu_info().vmem_capacity_bytes)
    except Exception:
        vmem = 64 * 2**20                      # conservative (v7x per-TC)
    if vmem >= 96 * 2**20:
        # v5e / v6e: 128 MiB VMEM, single TensorCore -> big tiles, any #steps.
        return 8 * 2**20, vmem - 32 * 2**20, 1
    # v7x-class: 64 MiB VMEM per TC, two TCs -> modest tiles, >=2 grid steps
    # so both cores get work via the "parallel" batch axis.
    return 4 * 2**20, vmem - 16 * 2**20, 2


def _pick_block_b(B, bytes_per_batch, target_bytes, min_steps):
    """Largest block_b whose (block_b, T, C) x-tile stays under target_bytes,
    capped so the grid has at least `min_steps` steps when B allows it."""
    bb = max(1, min(B, int(target_bytes // max(1, bytes_per_batch))))
    if min_steps > 1 and B >= min_steps:
        bb = min(bb, max(1, B // min_steps))
    return bb


# ----------------------------------------------------------------------------
# Public entry point
# ----------------------------------------------------------------------------
def ada_ins_norm(x, timestep, w_t, bias, *, num_steps, rescale_steps=4000.0,
                 eps=1e-5, block_b=None, two_pass=False, x_buffer_count=None):
    """x: (B, T, C) f32/bf16; timestep: (B,) int; w_t: (C, 2C); bias: (2C,).

    Matches AdaInsNorm.forward: x layout (B, T, C), InstanceNorm over T
    (biased variance, eps inside rsqrt, affine=False). Output dtype == x dtype.
    """
    B, T, C = x.shape
    scale, shift = _timestep_scale_shift(
        timestep, w_t, bias, C, float(num_steps), float(rescale_steps))
    scale = scale.reshape(B, 1, C)
    shift = shift.reshape(B, 1, C)

    itemsize = jnp.dtype(x.dtype).itemsize
    target_bytes, vmem_cap, min_steps = _tile_budget()
    if block_b is None:
        block_b = _pick_block_b(B, T * C * itemsize, target_bytes, min_steps)
    block_b = int(block_b)

    # Allow any B: pad the batch up to a multiple of block_b (padded rows are
    # fully independent and sliced off after the call).
    num_blocks = pl.cdiv(B, block_b)
    B_pad = num_blocks * block_b
    if B_pad != B:
        bpad = ((0, B_pad - B), (0, 0), (0, 0))
        x = jnp.pad(x, bpad)
        scale = jnp.pad(scale, bpad)
        shift = jnp.pad(shift, bpad)

    block_bytes = block_b * T * C * itemsize
    # Budget: 2x double-buffered in + 2x out + f32 intermediates + headroom.
    vmem_limit = int(min(vmem_cap, max(32 * 2**20, 12 * block_bytes)))

    kernel = functools.partial(_ada_ins_norm_kernel, eps=float(eps),
                               inv_t=1.0 / float(T), two_pass=bool(two_pass))

    cost = pl.CostEstimate(
        flops=5 * B * T * C,
        transcendentals=B * C,                         # one rsqrt per (b, c)
        bytes_accessed=2 * B * T * C * itemsize + 2 * B * C * 4,
    )

    if x_buffer_count:
        x_spec = pl.BlockSpec((block_b, T, C), lambda b: (b, 0, 0),
                              pipeline_mode=pl.Buffered(int(x_buffer_count)))
    else:
        x_spec = pl.BlockSpec((block_b, T, C), lambda b: (b, 0, 0))

    grid_spec = pltpu.PrefetchScalarGridSpec(
        num_scalar_prefetch=0,
        grid=(num_blocks,),
        in_specs=[
            pl.BlockSpec((block_b, 1, C), lambda b: (b, 0, 0)),   # scale
            pl.BlockSpec((block_b, 1, C), lambda b: (b, 0, 0)),   # shift
            x_spec,                                               # x
        ],
        out_specs=pl.BlockSpec((block_b, T, C), lambda b: (b, 0, 0)),
    )

    out = pl.pallas_call(
        kernel,
        out_shape=jax.ShapeDtypeStruct((B_pad, T, C), x.dtype),
        grid_spec=grid_spec,
        compiler_params=pltpu.CompilerParams(
            dimension_semantics=("parallel",),
            vmem_limit_bytes=vmem_limit),
        cost_estimate=cost,
    )(scale, shift, x)

    return out[:B] if B_pad != B else out


# ----------------------------------------------------------------------------
# Pure-JAX reference mirroring the PyTorch forward (for verification)
# ----------------------------------------------------------------------------
def _reference(x, timestep, w_t, bias, num_steps, rescale_steps=4000.0,
               eps=1e-5):
    B, T, C = x.shape
    half = C // 2
    t = timestep.astype(jnp.float32) / num_steps * rescale_steps
    freqs = jnp.exp(jnp.arange(half, dtype=jnp.float32)
                    * -(math.log(10000.0) / (half - 1)))
    e = t[:, None] * freqs[None, :]
    emb = jnp.concatenate([jnp.sin(e), jnp.cos(e)], axis=-1)        # (B, C)
    emb = emb * jax.nn.sigmoid(emb)                                 # SiLU
    proj = emb @ w_t + bias[None, :]                                # (B, 2C)
    scale, shift = proj[:, :C], proj[:, C:]
    xf = x.astype(jnp.float32)
    mean = xf.mean(axis=1, keepdims=True)
    var = ((xf - mean) ** 2).mean(axis=1, keepdims=True)
    xn = (xf - mean) / jnp.sqrt(var + eps)
    return xn * (1.0 + scale[:, None, :]) + shift[:, None, :]


if __name__ == "__main__":
    # Small shapes consistent with the module: batch=2, seq=16, n_embd=32.
    B, T, C = 2, 16, 32
    DIFFUSION_STEPS = 100

    key = jax.random.PRNGKey(0)
    kx, kw, kb, kt, kx3, kt3 = jax.random.split(key, 6)

    x = jax.random.normal(kx, (B, T, C), dtype=jnp.float32)
    timestep = jax.random.randint(kt, (B,), 0, DIFFUSION_STEPS,
                                  dtype=jnp.int32)

    # nn.Linear(n_embd, 2*n_embd): weight (2C, C), bias (2C,).
    # Stored transposed (C, 2C) for the (B,C)@(C,2C) projection.
    w_torch = jax.random.normal(kw, (2 * C, C), dtype=jnp.float32) * 0.05
    w_t = w_torch.T                                   # (C, 2C)
    bias = jax.random.normal(kb, (2 * C,), dtype=jnp.float32) * 0.05

    fn = jax.jit(functools.partial(ada_ins_norm, num_steps=DIFFUSION_STEPS))

    # float32 path
    out = jax.block_until_ready(fn(x, timestep, w_t, bias))
    ref = _reference(x, timestep, w_t, bias, DIFFUSION_STEPS)
    assert out.shape == (B, T, C) and out.dtype == x.dtype
    assert jnp.allclose(out, ref, atol=1e-4, rtol=1e-4), "f32 mismatch vs reference"

    # bf16 I/O path (stats still computed in f32 inside the kernel)
    x_bf16 = x.astype(jnp.bfloat16)
    out_bf16 = jax.block_until_ready(fn(x_bf16, timestep, w_t, bias))
    assert out_bf16.dtype == jnp.bfloat16
    assert jnp.allclose(out_bf16.astype(jnp.float32), ref,
                        atol=5e-2, rtol=5e-2), "bf16 mismatch vs reference"

    # Awkward batch (B=3) with a forced block_b=2 exercises the cdiv/padding
    # path, plus the two-pass centered-variance fallback.
    B3 = 3
    x3 = jax.random.normal(kx3, (B3, T, C), dtype=jnp.float32)
    timestep3 = jax.random.randint(kt3, (B3,), 0, DIFFUSION_STEPS,
                                   dtype=jnp.int32)
    fn3 = jax.jit(functools.partial(ada_ins_norm, num_steps=DIFFUSION_STEPS,
                                    block_b=2, two_pass=True))
    out3 = jax.block_until_ready(fn3(x3, timestep3, w_t, bias))
    ref3 = _reference(x3, timestep3, w_t, bias, DIFFUSION_STEPS)
    assert out3.shape == (B3, T, C)
    assert jnp.allclose(out3, ref3, atol=1e-4, rtol=1e-4), "padded-B mismatch"

    print("KERNEL_OK")
</pallas_src>

<mosaic_0001>
module attributes {stable_mosaic.version = 11 : i64} {
  func.func @_ada_ins_norm_kernel(%arg0: i32, %arg1: memref<1x1x32xf32, #tpu.memory_space<vmem>>, %arg2: memref<1x1x32xf32, #tpu.memory_space<vmem>>, %arg3: memref<1x16x32xf32, #tpu.memory_space<vmem>>, %arg4: memref<1x16x32xf32, #tpu.memory_space<vmem>>) attributes {dimension_semantics = [#tpu.dimension_semantics<parallel>], iteration_bounds = array<i64: 2>, scalar_prefetch = 0 : i64, scratch_operands = 0 : i64, tpu.core_type = #tpu.core_type<tc>, window_params = [{transform_indices = @transform_0, window_bounds = array<i64: 1, 1, 32>}, {transform_indices = @transform_1, window_bounds = array<i64: 1, 1, 32>}, {transform_indices = @transform_2, window_bounds = array<i64: 1, 16, 32>}, {transform_indices = @transform_3, window_bounds = array<i64: 1, 16, 32>}]} {
    %c0 = arith.constant 0 : index
    %c0_0 = arith.constant 0 : index
    %c0_1 = arith.constant 0 : index
    %0 = vector.load %arg3[%c0, %c0_0, %c0_1] : memref<1x16x32xf32, #tpu.memory_space<vmem>>, vector<1x16x32xf32>
    %cst = arith.constant dense<0.000000e+00> : vector<1x32xf32>
    %1 = vector.multi_reduction <add>, %0, %cst [1] : vector<1x16x32xf32> to vector<1x32xf32>
    %2 = vector.shape_cast %1 : vector<1x32xf32> to vector<1x1x32xf32>
    %3 = arith.mulf %0, %0 : vector<1x16x32xf32>
    %cst_2 = arith.constant dense<0.000000e+00> : vector<1x32xf32>
    %4 = vector.multi_reduction <add>, %3, %cst_2 [1] : vector<1x16x32xf32> to vector<1x32xf32>
    %5 = vector.shape_cast %4 : vector<1x32xf32> to vector<1x1x32xf32>
    %cst_3 = arith.constant 6.250000e-02 : f32
    %6 = vector.broadcast %cst_3 : f32 to vector<1x1x32xf32>
    %7 = arith.mulf %2, %6 : vector<1x1x32xf32>
    %cst_4 = arith.constant 6.250000e-02 : f32
    %8 = vector.broadcast %cst_4 : f32 to vector<1x1x32xf32>
    %9 = arith.mulf %5, %8 : vector<1x1x32xf32>
    %10 = arith.mulf %7, %7 : vector<1x1x32xf32>
    %11 = arith.subf %9, %10 : vector<1x1x32xf32>
    %cst_5 = arith.constant 0.000000e+00 : f32
    %12 = vector.broadcast %cst_5 : f32 to vector<1x1x32xf32>
    %13 = arith.maximumf %11, %12 : vector<1x1x32xf32>
    %cst_6 = arith.constant 9.99999974E-6 : f32
    %14 = vector.broadcast %cst_6 : f32 to vector<1x1x32xf32>
    %15 = arith.addf %13, %14 : vector<1x1x32xf32>
    %16 = math.rsqrt %15 : vector<1x1x32xf32>
    %c0_7 = arith.constant 0 : index
    %c0_8 = arith.constant 0 : index
    %c0_9 = arith.constant 0 : index
    %17 = vector.load %arg1[%c0_7, %c0_8, %c0_9] : memref<1x1x32xf32, #tpu.memory_space<vmem>>, vector<1x1x32xf32>
    %cst_10 = arith.constant 1.000000e+00 : f32
    %18 = vector.broadcast %cst_10 : f32 to vector<1x1x32xf32>
    %19 = arith.addf %18, %17 : vector<1x1x32xf32>
    %20 = arith.mulf %16, %19 : vector<1x1x32xf32>
    %c0_11 = arith.constant 0 : index
    %c0_12 = arith.constant 0 : index
    %c0_13 = arith.constant 0 : index
    %21 = vector.load %arg2[%c0_11, %c0_12, %c0_13] : memref<1x1x32xf32, #tpu.memory_space<vmem>>, vector<1x1x32xf32>
    %22 = arith.mulf %7, %20 : vector<1x1x32xf32>
    %23 = arith.subf %21, %22 : vector<1x1x32xf32>
    %24 = vector.broadcast %20 : vector<1x1x32xf32> to vector<1x16x32xf32>
    %25 = arith.mulf %0, %24 : vector<1x16x32xf32>
    %26 = vector.broadcast %23 : vector<1x1x32xf32> to vector<1x16x32xf32>
    %27 = arith.addf %25, %26 : vector<1x16x32xf32>
    %c0_14 = arith.constant 0 : index
    %c0_15 = arith.constant 0 : index
    %c0_16 = arith.constant 0 : index
    %28 = vector.load %arg4[%c0_14, %c0_15, %c0_16] : memref<1x16x32xf32, #tpu.memory_space<vmem>>, vector<1x16x32xf32>
    tpu.vector_store %arg4[%c0_14, %c0_15, %c0_16], %27 {strides = array<i32>} : memref<1x16x32xf32, #tpu.memory_space<vmem>>, vector<1x16x32xf32>,
    return
  }
  func.func @transform_0(%arg0: i32) -> (i32, i32, i32) {
    %c0_i32 = arith.constant 0 : i32
    %c0_i32_0 = arith.constant 0 : i32
    %c0_i32_1 = arith.constant 0 : i32
    return %arg0, %c0_i32, %c0_i32_0 : i32, i32, i32
  }
  func.func @transform_1(%arg0: i32) -> (i32, i32, i32) {
    %c0_i32 = arith.constant 0 : i32
    %c0_i32_0 = arith.constant 0 : i32
    %c0_i32_1 = arith.constant 0 : i32
    return %arg0, %c0_i32, %c0_i32_0 : i32, i32, i32
  }
  func.func @transform_2(%arg0: i32) -> (i32, i32, i32) {
    %c0_i32 = arith.constant 0 : i32
    %c0_i32_0 = arith.constant 0 : i32
    %c0_i32_1 = arith.constant 0 : i32
    return %arg0, %c0_i32, %c0_i32_0 : i32, i32, i32
  }
  func.func @transform_3(%arg0: i32) -> (i32, i32, i32) {
    %c0_i32 = arith.constant 0 : i32
    %c0_i32_0 = arith.constant 0 : i32
    %c0_i32_1 = arith.constant 0 : i32
    return %arg0, %c0_i32, %c0_i32_0 : i32, i32, i32
  }
}

</mosaic_0001>

<llo_original>
// kernel: ada_ins_norm.1
$region0: #{ada_ins_norm.1}
  #allocation0 [shape = 'u32[]', space=smem, size = 0x4, offset = 0x4, fixed_abs, tag = 'smem constant byte address 0x4 - core index']
  #allocation1 [shape = 'u32[72,128]{1,0:T(1,128)}', space=vmem, size = 0x9000, scoped, tag = 'internal scratch']
  %s0 = inlined_call_operand.vmem [shape: f32[2,1,32], index: 0, kind: input, shape index: {}]
  %s1 = inlined_call_operand.vmem [shape: f32[2,1,32], index: 1, kind: input, shape index: {}]
  %s2 = inlined_call_operand.vmem [shape: f32[2,16,32], index: 2, kind: input, shape index: {}]
  %s3 = inlined_call_operand.hbm [shape: f32[2,16,32], index: 3, kind: output, shape index: {}]
  %s4 = sld [smem:[#allocation0]]
  $region45: #{ada_ins_norm.1} parent=0
    _
  %s6 = ssub.s32 1, %s4
  %s7 = scalar_select 0, %s6, %s4
  $region1: #{ada_ins_norm.1} parent=0
    #allocation2 [shape = 'u8[16384]{0}', space=vmem, size = 0x4000, scoped, tag = 'output window, operand 0']
    #allocation3 [shape = 's32[2]{0}', space=sflag, size = 0x8, scoped, tag = 'scoped memory for ada_ins_norm.1']
    %8 = vsyncpa [#allocation3], 0
    %s9 = scalar_lea.sflag [#allocation3], 1
    %10 = vsyncpa %s9, 0
    loop: start=0, step=1, limit=4
    $region2: #{ada_ins_norm.1} parent=1 // loop_pre_header
      _
    $region3: #{ada_ins_norm.1} parent=1 // loop_header
      %s12 = sphi 0, %s16
      %p13 = scmp.ge.s32.totalorder %s12, 4
      %s22 = sphi 0, %s24
      %s25 = sphi 0, %s22
      %s26 = sphi 0, %s25
      %s42 = sphi 0, %s26
      %s48 = sphi 0, %s50
      %s51 = sphi 0, %s48
      %s52 = sphi 0, %s51
      %s68 = sphi 0, %s52
      %s74 = sphi 0, %s76
      %s77 = sphi 0, %s74
      %s78 = sphi 0, %s77
      %s94 = sphi 0, %s78
      %s100 = sphi 0, %s102
      %s103 = sphi 0, %s100
      %s104 = sphi 0, %s103
      %s120 = sphi 0, %s104
    $region4: #{ada_ins_norm.1} parent=1 // loop_header_branch
      %15 = sbr.rel (%p13) target = $region8
    $region5: #{ada_ins_norm.1} parent=1 // loop_body
      %s17 = ssub.s32 %s12, 1
      %s18 = ssub.s32 %s12, 2
      %s19 = sadd.s32 %s12, 1
      %s20 = ssub.s32 %s12, %s19
      %p21 = scmp.eq.s32.totalorder %s20, 0
      %s23 = sadd.s32 %s22, 1
      %s24 = scalar_select %p21, %s22, %s23
      %p27 = pneg %p21
      %p28 = scmp.eq.s32.totalorder %s12, 1
      %p29 = por %p27, %p28
      %p30 = scmp.ne.s32.totalorder %s22, %s25
      %p31 = scmp.eq.s32.totalorder %s12, 0
      %p32 = por %p30, %p31
      %p33 = scmp.ne.s32.totalorder %s22, %s25
      %p34 = scmp.eq.s32.totalorder %s17, 1
      %p35 = por %p33, %p34
      %p36 = scmp.ne.s32.totalorder %s25, %s26
      %p37 = scmp.eq.s32.totalorder %s17, 0
      %p38 = por %p36, %p37
      %p39 = scmp.ne.s32.totalorder %s25, %s26
      %p40 = scmp.eq.s32.totalorder %s18, 1
      %p41 = por %p39, %p40
      %p43 = scmp.ne.s32.totalorder %s26, %s42
      %p44 = scmp.eq.s32.totalorder %s18, 0
      %p45 = por %p43, %p44
      %s46 = ssub.s32 %s12, %s19
      %p47 = scmp.eq.s32.totalorder %s46, 0
      %s49 = sadd.s32 %s48, 1
      %s50 = scalar_select %p47, %s48, %s49
      %p53 = pneg %p47
      %p54 = scmp.eq.s32.totalorder %s12, 1
      %p55 = por %p53, %p54
      %p56 = scmp.ne.s32.totalorder %s48, %s51
      %p57 = scmp.eq.s32.totalorder %s12, 0
      %p58 = por %p56, %p57
      %p59 = scmp.ne.s32.totalorder %s48, %s51
      %p60 = scmp.eq.s32.totalorder %s17, 1
      %p61 = por %p59, %p60
      %p62 = scmp.ne.s32.totalorder %s51, %s52
      %p63 = scmp.eq.s32.totalorder %s17, 0
      %p64 = por %p62, %p63
      %p65 = scmp.ne.s32.totalorder %s51, %s52
      %p66 = scmp.eq.s32.totalorder %s18, 1
      %p67 = por %p65, %p66
      %p69 = scmp.ne.s32.totalorder %s52, %s68
      %p70 = scmp.eq.s32.totalorder %s18, 0
      %p71 = por %p69, %p70
      %s72 = ssub.s32 %s12, %s19
      %p73 = scmp.eq.s32.totalorder %s72, 0
      %s75 = sadd.s32 %s74, 1
      %s76 = scalar_select %p73, %s74, %s75
      %p79 = pneg %p73
      %p80 = scmp.eq.s32.totalorder %s12, 1
      %p81 = por %p79, %p80
      %p82 = scmp.ne.s32.totalorder %s74, %s77
      %p83 = scmp.eq.s32.totalorder %s12, 0
      %p84 = por %p82, %p83
      %p85 = scmp.ne.s32.totalorder %s74, %s77
      %p86 = scmp.eq.s32.totalorder %s17, 1
      %p87 = por %p85, %p86
      %p88 = scmp.ne.s32.totalorder %s77, %s78
      %p89 = scmp.eq.s32.totalorder %s17, 0
      %p90 = por %p88, %p89
      %p91 = scmp.ne.s32.totalorder %s77, %s78
      %p92 = scmp.eq.s32.totalorder %s18, 1
      %p93 = por %p91, %p92
      %p95 = scmp.ne.s32.totalorder %s78, %s94
      %p96 = scmp.eq.s32.totalorder %s18, 0
      %p97 = por %p95, %p96
      %s98 = ssub.s32 %s12, %s19
      %p99 = scmp.eq.s32.totalorder %s98, 0
      %s101 = sadd.s32 %s100, 1
      %s102 = scalar_select %p99, %s100, %s101
      %p105 = pneg %p99
      %p106 = scmp.eq.s32.totalorder %s12, 1
      %p107 = por %p105, %p106
      %p108 = scmp.ne.s32.totalorder %s100, %s103
      %p109 = scmp.eq.s32.totalorder %s12, 0
      %p110 = por %p108, %p109
      %p111 = scmp.ne.s32.totalorder %s100, %s103
      %p112 = scmp.eq.s32.totalorder %s17, 1
      %p113 = por %p111, %p112
      %p114 = scmp.ne.s32.totalorder %s103, %s104
      %p115 = scmp.eq.s32.totalorder %s17, 0
      %p116 = por %p114, %p115
      %p117 = scmp.ne.s32.totalorder %s103, %s104
      %p118 = scmp.eq.s32.totalorder %s18, 1
      %p119 = por %p117, %p118
      %p121 = scmp.ne.s32.totalorder %s104, %s120
      %p122 = scmp.eq.s32.totalorder %s18, 0
      %p123 = por %p121, %p122
      %p124 = scmp.le.s32.totalorder 1, %s12
      %p125 = scmp.lt.s32.totalorder %s12, 3
      %p126 = pnand %p124, %p125
      %p127 = pneg %p126
      // Predicated region
      $region9: #{ada_ins_norm.1} parent=5 // pred_check
        _
      $region10: #{ada_ins_norm.1} parent=5 // pred_check_branch
        %129 = sbr.rel (%p126) target = $region12
      $region11: #{ada_ins_norm.1} parent=5 // pred_region
        %s130 = ssub.s32 %s12, 1
      $region12: #{ada_ins_norm.1} parent=5 // pred_fallthru
        _
      %p131 = scmp.lt.s32.totalorder %s12, 2
      // Predicated region
      $region13: #{ada_ins_norm.1} parent=5 // pred_check
        %p132 = pneg %p131
      $region14: #{ada_ins_norm.1} parent=5 // pred_check_branch
        %134 = sbr.rel (%p132) target = $region16
      $region15: #{ada_ins_norm.1} parent=5 // pred_region
        // Predicated region
        $region17: #{ada_ins_norm.1} parent=15 // pred_check
          %p135 = pneg %p32
        $region18: #{ada_ins_norm.1} parent=15 // pred_check_branch
          %137 = sbr.rel (%p135) target = $region20
        $region19: #{ada_ins_norm.1} parent=15 // pred_region
          %p138 = scmp.lt.s32.totalorder %s12, 1
          %s139 = scalar_select %p138, %s12, 1
          %s140 = scalar_lea.vmem %s0, %s139
        $region20: #{ada_ins_norm.1} parent=15 // pred_fallthru
          _
        // Predicated region
        $region21: #{ada_ins_norm.1} parent=15 // pred_check
          %p141 = pneg %p58
        $region22: #{ada_ins_norm.1} parent=15 // pred_check_branch
          %143 = sbr.rel (%p141) target = $region24
        $region23: #{ada_ins_norm.1} parent=15 // pred_region
          %p144 = scmp.lt.s32.totalorder %s12, 1
          %s145 = scalar_select %p144, %s12, 1
          %s146 = scalar_lea.vmem %s1, %s145
        $region24: #{ada_ins_norm.1} parent=15 // pred_fallthru
          _
        // Predicated region
        $region25: #{ada_ins_norm.1} parent=15 // pred_check
          %p147 = pneg %p84
        $region26: #{ada_ins_norm.1} parent=15 // pred_check_branch
          %149 = sbr.rel (%p147) target = $region28
        $region27: #{ada_ins_norm.1} parent=15 // pred_region
          %p150 = scmp.lt.s32.totalorder %s12, 1
          %s151 = scalar_select %p150, %s12, 1
          %s152 = smul.addr %s151, 2
          %s153 = smul.addr %s152, 8
          %s154 = scalar_lea.vmem %s2, %s153
        $region28: #{ada_ins_norm.1} parent=15 // pred_fallthru
          _
      $region16: #{ada_ins_norm.1} parent=5 // pred_fallthru
        _
      %p155 = scmp.le.s32.totalorder 1, %s12
      %p156 = scmp.lt.s32.totalorder %s12, 3
      %p157 = pnand %p155, %p156
      %p158 = pneg %p157
      // Predicated region
      $region29: #{ada_ins_norm.1} parent=5 // pred_check
        _
      $region30: #{ada_ins_norm.1} parent=5 // pred_check_branch
        %160 = sbr.rel (%p157) target = $region32
      $region31: #{ada_ins_norm.1} parent=5 // pred_region
        %s161 = ssub.s32 %s12, 1
        %p162 = scmp.lt.s32.totalorder %s17, 1
        %s163 = scalar_select %p162, %s17, 1
        %s164 = scalar_lea.vmem %s0, %s163
        %p165 = pneg %p38
        %p166 = pneg %p35
        %p167 = scmp.lt.s32.totalorder %s17, 1
        %s168 = scalar_select %p167, %s17, 1
        %s169 = scalar_lea.vmem %s1, %s168
        %p170 = pneg %p64
        %p171 = pneg %p61
        %p172 = scmp.lt.s32.totalorder %s17, 1
        %s173 = scalar_select %p172, %s17, 1
        %s174 = smul.addr %s173, 2
        %s175 = smul.addr %s174, 8
        %s176 = scalar_lea.vmem %s2, %s175
        %p177 = pneg %p90
        %p178 = pneg %p87
        %p179 = pneg %p116
        %p180 = pneg %p113
        %s181 = sand.u32 %s103, 1
        %s182 = scalar_lea.sflag [#allocation3], %s181
        %s183 = sand.u32 %s103, 1
        %s184 = smul.addr %s183, 16
        %s185 = scalar_lea.vmem [#allocation2], %s184
        %p186 = scmp.lt.s32.totalorder %s17, 1
        %s187 = scalar_select %p186, %s17, 1
        %s188 = scalar_lea.vmem %s0, %s187
        %p189 = scmp.lt.s32.totalorder %s17, 1
        %s190 = scalar_select %p189, %s17, 1
        %s191 = scalar_lea.vmem %s1, %s190
        %p192 = scmp.lt.s32.totalorder %s17, 1
        %s193 = scalar_select %p192, %s17, 1
        %s194 = smul.addr %s193, 2
        %s195 = smul.addr %s194, 8
        %s196 = scalar_lea.vmem %s2, %s195
        %v197 = vld [vmem:[%s196] sm:$0xff]
        %v198 = vld [vmem:[%s196 + $0x8] sm:$0xff]
        %vm199 = vcmask 261120
        %v200 = vsel %vm199, %v197, 0.0
        %v201 = vsel %vm199, %v198, 0.0
        %v202 = vadd.f32 %v200, %v201
        %v203 = vrot.slane %v202, 4
        %v204 = vadd.f32 %v202, %v203
        %v205 = vrot.slane %v204, 2
        %v206 = vadd.f32 %v204, %v205
        %v207 = vrot.slane %v206, 1
        %v208 = vadd.f32 %v206, %v207
        %v209 = vmul.f32 %v197, %v197
        %v210 = vmul.f32 %v198, %v198
        %v211 = vsel %vm199, %v209, 0.0
        %v212 = vsel %vm199, %v210, 0.0
        %v213 = vadd.f32 %v211, %v212
        %v214 = vrot.slane %v213, 4
        %v215 = vadd.f32 %v213, %v214
        %v216 = vrot.slane %v215, 2
        %v217 = vadd.f32 %v215, %v216
        %v218 = vrot.slane %v217, 1
        %v219 = vadd.f32 %v217, %v218
        %v220 = vmul.f32 %v208, 0.0625
        %v221 = vmul.f32 %v219, 0.0625
        %v222 = vmul.f32 %v220, %v220
        %v223 = vsub.f32 %v221, %v222
        %v224 = vmax.f32 %v223, 0.0
        %v225 = vadd.f32 %v224, 1e-05
        %v226 = vrsqrt.pop %v225
        %v227 = vmul.f32 %v226, %v225
        %v228 = vmul.f32 %v227, %v226
        %v229 = vmul.f32 0.5, %v228
        %v230 = vsub.f32 1.5, %v229
        %v231 = vmul.f32 %v226, %v230
        %vm232 = vweird.f32 %v225
        %vm233 = vweird.f32 %v226
        %vm234 = vmor %vm232, %vm233
        %v235 = vsel %vm234, %v226, %v231
        %v236 = vld [vmem:[%s188] sm:$0x1]
        %v237 = vadd.f32 %v236, 1.0
        %v238 = vmul.f32 %v235, %v237
        %v239 = vld [vmem:[%s191] sm:$0x1]
        %v240 = vmul.f32 %v220, %v238
        %v241 = vsub.f32 %v239, %v240
        %v242 = vperm.slane %v238, 0
        %v243 = vmul.f32 %v197, %v242
        %v244 = vmul.f32 %v198, %v242
        %v246 = vperm.slane %v241, 0
        %v248 = vadd.f32 %v243, %v246
        %v249 = vadd.f32 %v244, %v246
        %250 = vst.msk [vmem:[%s185] sm:$0xff] %vm199, %v248
        %251 = vst.msk [vmem:[%s185 + $0x8] sm:$0xff] %vm199, %v249
        %s252 = sand.u32 %s103, 1
        %s253 = scalar_lea.sflag [#allocation3], %s252
        %s254 = sand.u32 %s103, 1
        %s255 = smul.addr %s254, 16
        %s256 = scalar_lea.vmem [#allocation2], %s255
        // Predicated region
        $region33: #{ada_ins_norm.1} parent=31 // pred_check
          %p257 = pneg %p113
        $region34: #{ada_ins_norm.1} parent=31 // pred_check_branch
          %259 = sbr.rel (%p257) target = $region36
        $region35: #{ada_ins_norm.1} parent=31 // pred_region
          %261 = vsyncadd %s253, 0
          %s262 = smul.addr %s17, 2
          %s263 = smul.addr %s262, 8
          %s264 = scalar_lea.hbm %s3, %s263
          %s265 = sshll.u32 %s256, 4
          %s266 = int_to_ptr.vmem [resolvable:$true] %s265
          %s267 = sshll.u32 %s264, 4
          %s268 = int_to_ptr.hbm [resolvable:$true] %s267
          %273 = dma.vmem_to_hbm [thread:$0]  %s266, 256, %s268, %s253, 128, 128, 8
        $region36: #{ada_ins_norm.1} parent=31 // pred_fallthru
          _
      $region32: #{ada_ins_norm.1} parent=5 // pred_fallthru
        _
      %p274 = scmp.le.s32.totalorder 2, %s12
      // Predicated region
      $region37: #{ada_ins_norm.1} parent=5 // pred_check
        %p275 = pneg %p274
      $region38: #{ada_ins_norm.1} parent=5 // pred_check_branch
        %277 = sbr.rel (%p275) target = $region40
      $region39: #{ada_ins_norm.1} parent=5 // pred_region
        %s278 = ssub.s32 %s12, 2
        // Predicated region
        $region41: #{ada_ins_norm.1} parent=39 // pred_check
          %p279 = pneg %p119
        $region42: #{ada_ins_norm.1} parent=39 // pred_check_branch
          %281 = sbr.rel (%p279) target = $region44
        $region43: #{ada_ins_norm.1} parent=39 // pred_region
          %s282 = sand.u32 %s104, 1
          %s283 = scalar_lea.sflag [#allocation3], %s282
          %s284 = sand.u32 %s104, 1
          %s285 = smul.addr %s284, 16
          %s286 = scalar_lea.vmem [#allocation2], %s285
          %288 = dma.done %s283, 256
        $region44: #{ada_ins_norm.1} parent=39 // pred_fallthru
          _
      $region40: #{ada_ins_norm.1} parent=5 // pred_fallthru
        _
    $region6: #{ada_ins_norm.1} parent=1 // loop_footer
      %s16 = sadd.s32 1, %s12
    $region7: #{ada_ins_norm.1} parent=1 // loop_footer_branch
      %11 = sbr.rel target = $region3
    $region8: #{ada_ins_norm.1} parent=1 // loop_exit
      _
    %289 = vsyncpa [#allocation3], 1
    %s290 = scalar_lea.sflag [#allocation3], 1
    %291 = vsyncpa %s290, 1

</llo_original>
